<compile_context>
chip_gen: v7x
topology: tpu7x:2x2x1
jax: 0.10.0
libtpu: 0.0.40
codegen_flags: <defaults>
</compile_context>

<pallas_src>
import jax
import jax.numpy as jnp
from jax import lax
from jax.experimental import pallas as pl
from jax.experimental.pallas import tpu as pltpu


def _make_branchnet_kernel(hidden_layers, activation, compute_dtype):
    """Builds the kernel body for a given (static) depth / activation / dtype."""

    def kernel(*refs):
        x_ref, w_in_ref, b_in_ref = refs[0], refs[1], refs[2]
        if hidden_layers > 0:
            w_hid_ref, b_hid_ref = refs[3], refs[4]
            w_out_ref, b_out_ref, out_ref = refs[5], refs[6], refs[7]
        else:
            w_hid_ref = b_hid_ref = None
            w_out_ref, b_out_ref, out_ref = refs[3], refs[4], refs[5]

        # Input layer: (tb, F) @ (F, H) on the MXU with f32 accumulation,
        # bias add on the VPU, tanh on the EUP.  Activations carried in f32.
        h = activation(
            jnp.dot(x_ref[...], w_in_ref[...],
                    preferred_element_type=jnp.float32)
            + b_in_ref[...].astype(jnp.float32))

        def hidden_step(h, w, b):
            return activation(
                jnp.dot(h.astype(compute_dtype), w,
                        preferred_element_type=jnp.float32)
                + b.astype(jnp.float32))

        if hidden_layers > 0:
            if hidden_layers <= 4:
                # Shallow: static unroll is neutral and gives LLO full view.
                for i in range(hidden_layers):
                    h = hidden_step(h, w_hid_ref[i], b_hid_ref[i])
            else:
                # Deep: bound code size / vreg live ranges with a real loop.
                def body(i, h):
                    return hidden_step(h, w_hid_ref[i], b_hid_ref[i])
                h = lax.fori_loop(0, hidden_layers, body, h)

        # Output head (no activation), written lane-dense as (tb, O).
        out_ref[...] = (
            jnp.dot(h.astype(compute_dtype), w_out_ref[...],
                    preferred_element_type=jnp.float32)
            + b_out_ref[...].astype(jnp.float32)).astype(out_ref.dtype)

    return kernel


def _padded_bytes(shape, dtype):
    """VMEM footprint upper bound: last two dims padded to the (8,128) tile."""
    dims = list(shape)
    if len(dims) >= 2:
        dims[-2] = -(-dims[-2] // 8) * 8
    if len(dims) >= 1:
        dims[-1] = -(-dims[-1] // 128) * 128
    n = 1
    for d in dims:
        n *= int(d)
    return n * jnp.dtype(dtype).itemsize


def branchnet_forward(x, params, activation=jnp.tanh, batch_tile=None,
                      matmul_dtype=None):
    """Runs BranchNet. x: [B, input_dim]. Returns [B, output_dim] f32.

    params = (w_in [F,H], b_in [1,H], w_hid [L,H,H], b_hid [L,1,H],
              w_out [H,O], b_out [1,O])   — weights in [in, out] layout.
    matmul_dtype: optional dtype (e.g. jnp.bfloat16) for x / weight operands
    of the matmuls; biases, accumulation and the activation stay f32.
    """
    w_in, b_in, w_hid, b_hid, w_out, b_out = params
    B, F = x.shape
    H = w_in.shape[1]
    O = w_out.shape[1]
    L = int(w_hid.shape[0]) if (w_hid is not None and w_hid.shape[0] > 0) else 0

    # ---- Batch tiling heuristic (perf review) -------------------------------
    # The grid is a *sequential* loop on 1-TC chips (v5e/v6e); a split only
    # buys cross-TC parallelism on v7x and costs one extra pipeline step
    # (~0.35 us) plus a duplicated weight DMA.  Only split when each tile
    # carries enough MACs to amortize that.
    _SPLIT_MIN_MACS_PER_TILE = 128 * 1024
    if batch_tile is None:
        macs_per_half = (B // 2) * (F * H + L * H * H + H * O)
        if (B % 2 == 0 and (B // 2) % 8 == 0
                and macs_per_half >= _SPLIT_MIN_MACS_PER_TILE):
            batch_tile = B // 2
        else:
            batch_tile = B
    if B % batch_tile != 0:
        raise ValueError(f"batch_tile={batch_tile} must divide batch={B}")
    num_tiles = B // batch_tile

    # ---- Optional low-precision matmul operands -----------------------------
    compute_dtype = jnp.dtype(matmul_dtype) if matmul_dtype is not None else x.dtype
    if x.dtype != compute_dtype:
        x = x.astype(compute_dtype)
    _wcast = lambda w: w if w.dtype == compute_dtype else w.astype(compute_dtype)
    w_in, w_out = _wcast(w_in), _wcast(w_out)
    if L > 0:
        w_hid = _wcast(w_hid)

    kernel = _make_branchnet_kernel(L, activation, compute_dtype)

    # Weight specs use a constant index_map -> grid-invariant, DMA'd once per
    # grid tile (once total for grid=(1,)).
    const2 = lambda i: (0, 0)
    const3 = lambda i: (0, 0, 0)

    in_specs = [
        pl.BlockSpec((batch_tile, F), lambda i: (i, 0)),   # x tile
        pl.BlockSpec((F, H), const2),                      # W_in
        pl.BlockSpec((1, H), const2),                      # b_in (f32)
    ]
    args = [x, w_in, b_in]
    if L > 0:
        in_specs += [
            pl.BlockSpec((L, H, H), const3),               # stacked hidden W
            pl.BlockSpec((L, 1, H), const3),               # stacked hidden b
        ]
        args += [w_hid, b_hid]
    in_specs += [
        pl.BlockSpec((H, O), const2),                      # W_out
        pl.BlockSpec((1, O), const2),                      # b_out (f32)
    ]
    args += [w_out, b_out]

    # ---- Cost estimate (helps XLA schedule around the custom call) ----------
    flops = 2 * B * (F * H + L * H * H + H * O) + B * ((L + 1) * H + O)
    transcendentals = B * H * (L + 1)                      # tanh on the EUP
    param_bytes = sum(int(a.size) * a.dtype.itemsize for a in args[1:])
    bytes_accessed = (int(x.size) * x.dtype.itemsize
                      + num_tiles * param_bytes            # weights per tile
                      + B * O * 4)
    cost = pl.CostEstimate(flops=flops, transcendentals=transcendentals,
                           bytes_accessed=bytes_accessed)

    # ---- VMEM budget: raise the scoped limit when the (double-buffered) ----
    # resident weight block would exceed v5e's 16 MiB default scoped VMEM.
    vmem_est = 2 * sum(_padded_bytes(s.block_shape,
                                     a.dtype) for s, a in zip(in_specs, args))
    vmem_est += 2 * _padded_bytes((batch_tile, O), jnp.float32)
    vmem_limit = None
    if vmem_est > 12 * 1024 * 1024:
        # Headroom, but stay below physical VMEM (64 MiB on v7x per TC needs
        # layer-streaming well before this cap is reached).
        vmem_limit = min(int(vmem_est * 3 // 2), 96 * 1024 * 1024)

    compiler_params = pltpu.CompilerParams(
        dimension_semantics=(("parallel",) if num_tiles > 1 else ("arbitrary",)),
        vmem_limit_bytes=vmem_limit,
    )

    return pl.pallas_call(
        kernel,
        out_shape=jax.ShapeDtypeStruct((B, O), jnp.float32),
        grid=(num_tiles,),
        in_specs=in_specs,
        out_specs=pl.BlockSpec((batch_tile, O), lambda i: (i, 0)),
        compiler_params=compiler_params,
        cost_estimate=cost,
    )(*args)


def _reference(x, params, activation=jnp.tanh):
    """Pure-JAX reference of the PyTorch BranchNet forward."""
    w_in, b_in, w_hid, b_hid, w_out, b_out = params
    h = activation(x @ w_in + b_in)
    for i in range(w_hid.shape[0]):
        h = activation(h @ w_hid[i] + b_hid[i])
    return h @ w_out + b_out


def make_params(key, input_dim, hidden_dim, output_dim, hidden_layers):
    """Deterministic synthetic parameters, weights stored as [in, out]."""
    ks = jax.random.split(key, 6)
    w_in = jax.random.normal(ks[0], (input_dim, hidden_dim), jnp.float32) * 0.2
    b_in = jax.random.normal(ks[1], (1, hidden_dim), jnp.float32) * 0.05
    w_hid = jax.random.normal(
        ks[2], (hidden_layers, hidden_dim, hidden_dim), jnp.float32) * 0.2
    b_hid = jax.random.normal(
        ks[3], (hidden_layers, 1, hidden_dim), jnp.float32) * 0.05
    w_out = jax.random.normal(ks[4], (hidden_dim, output_dim), jnp.float32) * 0.2
    b_out = jax.random.normal(ks[5], (1, output_dim), jnp.float32) * 0.05
    return (w_in, b_in, w_hid, b_hid, w_out, b_out)


if __name__ == "__main__":
    # Small shapes consistent with the module:
    #   batch=16, input_dim=8, hidden_dim=32, output_dim=4, hidden_layers=2,
    #   activation = tanh.
    B, F, H, O, L = 16, 8, 32, 4, 2
    key = jax.random.PRNGKey(0)
    kx, kp = jax.random.split(key)
    x = jax.random.normal(kx, (B, F), jnp.float32)
    params = make_params(kp, F, H, O, L)
    y_ref = _reference(x, params, activation=jnp.tanh)

    # f32 path (default): single grid step, exact match against the reference.
    y = jax.block_until_ready(branchnet_forward(x, params, activation=jnp.tanh))
    assert y.shape == (B, O)
    assert jnp.allclose(y, y_ref, atol=1e-5, rtol=1e-5), "f32 mismatch vs reference"

    # bf16-matmul path (for scaled-up nets): halves weight traffic, MXU bf16
    # peak; accumulation / bias / tanh stay f32.  Looser tolerance expected.
    y_bf16 = jax.block_until_ready(
        branchnet_forward(x, params, activation=jnp.tanh,
                          matmul_dtype=jnp.bfloat16))
    assert jnp.allclose(y_bf16, y_ref, atol=5e-2, rtol=5e-2), "bf16 mismatch"

    print("KERNEL_OK")
</pallas_src>

<mosaic_0001>
module attributes {stable_mosaic.version = 11 : i64} {
  func.func @kernel(%arg0: i32, %arg1: memref<16x8xf32, #tpu.memory_space<vmem>>, %arg2: memref<8x32xf32, #tpu.memory_space<vmem>>, %arg3: memref<1x32xf32, #tpu.memory_space<vmem>>, %arg4: memref<2x32x32xf32, #tpu.memory_space<vmem>>, %arg5: memref<2x1x32xf32, #tpu.memory_space<vmem>>, %arg6: memref<32x4xf32, #tpu.memory_space<vmem>>, %arg7: memref<1x4xf32, #tpu.memory_space<vmem>>, %arg8: memref<16x4xf32, #tpu.memory_space<vmem>>) attributes {dimension_semantics = [#tpu.dimension_semantics<arbitrary>], iteration_bounds = array<i64: 1>, scalar_prefetch = 0 : i64, scratch_operands = 0 : i64, tpu.core_type = #tpu.core_type<tc>, window_params = [{transform_indices = @transform_0, window_bounds = array<i64: 16, 8>}, {pipeline_mode = #tpu.pipeline_mode<synchronous>, transform_indices = @transform_1, window_bounds = array<i64: 8, 32>}, {pipeline_mode = #tpu.pipeline_mode<synchronous>, transform_indices = @transform_2, window_bounds = array<i64: 1, 32>}, {pipeline_mode = #tpu.pipeline_mode<synchronous>, transform_indices = @transform_3, window_bounds = array<i64: 2, 32, 32>}, {pipeline_mode = #tpu.pipeline_mode<synchronous>, transform_indices = @transform_4, window_bounds = array<i64: 2, 1, 32>}, {pipeline_mode = #tpu.pipeline_mode<synchronous>, transform_indices = @transform_5, window_bounds = array<i64: 32, 4>}, {pipeline_mode = #tpu.pipeline_mode<synchronous>, transform_indices = @transform_6, window_bounds = array<i64: 1, 4>}, {transform_indices = @transform_7, window_bounds = array<i64: 16, 4>}]} {
    %c0 = arith.constant 0 : index
    %c0_0 = arith.constant 0 : index
    %0 = vector.load %arg1[%c0, %c0_0] : memref<16x8xf32, #tpu.memory_space<vmem>>, vector<16x8xf32>
    %c0_1 = arith.constant 0 : index
    %c0_2 = arith.constant 0 : index
    %1 = vector.load %arg2[%c0_1, %c0_2] : memref<8x32xf32, #tpu.memory_space<vmem>>, vector<8x32xf32>
    %cst = arith.constant dense<0.000000e+00> : vector<16x32xf32>
    %2 = tpu.matmul %0, %1, %cst {dimension_numbers = #tpu.dot_dimension_numbers<[1], [0], [0], [1], [0, 0, 1, 1], [], []>} : vector<16x8xf32>, vector<8x32xf32>, vector<16x32xf32> -> vector<16x32xf32>
    %c0_3 = arith.constant 0 : index
    %c0_4 = arith.constant 0 : index
    %3 = vector.load %arg3[%c0_3, %c0_4] : memref<1x32xf32, #tpu.memory_space<vmem>>, vector<1x32xf32>
    %4 = vector.broadcast %3 : vector<1x32xf32> to vector<16x32xf32>
    %5 = arith.addf %2, %4 : vector<16x32xf32>
    %6 = math.tanh %5 : vector<16x32xf32>
    %c0_5 = arith.constant 0 : index
    %c0_6 = arith.constant 0 : index
    %c0_7 = arith.constant 0 : index
    %7 = vector.load %arg4[%c0_5, %c0_6, %c0_7] : memref<2x32x32xf32, #tpu.memory_space<vmem>>, vector<1x32x32xf32>
    %8 = vector.shape_cast %7 : vector<1x32x32xf32> to vector<32x32xf32>
    %c0_8 = arith.constant 0 : index
    %c0_9 = arith.constant 0 : index
    %c0_10 = arith.constant 0 : index
    %9 = vector.load %arg5[%c0_8, %c0_9, %c0_10] : memref<2x1x32xf32, #tpu.memory_space<vmem>>, vector<1x1x32xf32>
    %10 = vector.shape_cast %9 : vector<1x1x32xf32> to vector<1x32xf32>
    %cst_11 = arith.constant dense<0.000000e+00> : vector<16x32xf32>
    %11 = tpu.matmul %6, %8, %cst_11 {dimension_numbers = #tpu.dot_dimension_numbers<[1], [0], [0], [1], [0, 0, 1, 1], [], []>} : vector<16x32xf32>, vector<32x32xf32>, vector<16x32xf32> -> vector<16x32xf32>
    %12 = vector.broadcast %10 : vector<1x32xf32> to vector<16x32xf32>
    %13 = arith.addf %11, %12 : vector<16x32xf32>
    %14 = math.tanh %13 : vector<16x32xf32>
    %c1 = arith.constant 1 : index
    %c0_12 = arith.constant 0 : index
    %c0_13 = arith.constant 0 : index
    %15 = vector.load %arg4[%c1, %c0_12, %c0_13] : memref<2x32x32xf32, #tpu.memory_space<vmem>>, vector<1x32x32xf32>
    %16 = vector.shape_cast %15 : vector<1x32x32xf32> to vector<32x32xf32>
    %c1_14 = arith.constant 1 : index
    %c0_15 = arith.constant 0 : index
    %c0_16 = arith.constant 0 : index
    %17 = vector.load %arg5[%c1_14, %c0_15, %c0_16] : memref<2x1x32xf32, #tpu.memory_space<vmem>>, vector<1x1x32xf32>
    %18 = vector.shape_cast %17 : vector<1x1x32xf32> to vector<1x32xf32>
    %cst_17 = arith.constant dense<0.000000e+00> : vector<16x32xf32>
    %19 = tpu.matmul %14, %16, %cst_17 {dimension_numbers = #tpu.dot_dimension_numbers<[1], [0], [0], [1], [0, 0, 1, 1], [], []>} : vector<16x32xf32>, vector<32x32xf32>, vector<16x32xf32> -> vector<16x32xf32>
    %20 = vector.broadcast %18 : vector<1x32xf32> to vector<16x32xf32>
    %21 = arith.addf %19, %20 : vector<16x32xf32>
    %22 = math.tanh %21 : vector<16x32xf32>
    %c0_18 = arith.constant 0 : index
    %c0_19 = arith.constant 0 : index
    %23 = vector.load %arg6[%c0_18, %c0_19] : memref<32x4xf32, #tpu.memory_space<vmem>>, vector<32x4xf32>
    %cst_20 = arith.constant dense<0.000000e+00> : vector<16x4xf32>
    %24 = tpu.matmul %22, %23, %cst_20 {dimension_numbers = #tpu.dot_dimension_numbers<[1], [0], [0], [1], [0, 0, 1, 1], [], []>} : vector<16x32xf32>, vector<32x4xf32>, vector<16x4xf32> -> vector<16x4xf32>
    %c0_21 = arith.constant 0 : index
    %c0_22 = arith.constant 0 : index
    %25 = vector.load %arg7[%c0_21, %c0_22] : memref<1x4xf32, #tpu.memory_space<vmem>>, vector<1x4xf32>
    %26 = vector.broadcast %25 : vector<1x4xf32> to vector<16x4xf32>
    %27 = arith.addf %24, %26 : vector<16x4xf32>
    %c0_23 = arith.constant 0 : index
    %c0_24 = arith.constant 0 : index
    %28 = vector.load %arg8[%c0_23, %c0_24] : memref<16x4xf32, #tpu.memory_space<vmem>>, vector<16x4xf32>
    tpu.vector_store %arg8[%c0_23, %c0_24], %27 {strides = array<i32>} : memref<16x4xf32, #tpu.memory_space<vmem>>, vector<16x4xf32>,
    return
  }
  func.func @transform_0(%arg0: i32) -> (i32, i32) {
    %c0_i32 = arith.constant 0 : i32
    %c0_i32_0 = arith.constant 0 : i32
    return %arg0, %c0_i32 : i32, i32
  }
  func.func @transform_1(%arg0: i32) -> (i32, i32) {
    %c0_i32 = arith.constant 0 : i32
    %c0_i32_0 = arith.constant 0 : i32
    %c0_i32_1 = arith.constant 0 : i32
    return %c0_i32, %c0_i32_0 : i32, i32
  }
  func.func @transform_2(%arg0: i32) -> (i32, i32) {
    %c0_i32 = arith.constant 0 : i32
    %c0_i32_0 = arith.constant 0 : i32
    %c0_i32_1 = arith.constant 0 : i32
    return %c0_i32, %c0_i32_0 : i32, i32
  }
  func.func @transform_3(%arg0: i32) -> (i32, i32, i32) {
    %c0_i32 = arith.constant 0 : i32
    %c0_i32_0 = arith.constant 0 : i32
    %c0_i32_1 = arith.constant 0 : i32
    %c0_i32_2 = arith.constant 0 : i32
    return %c0_i32, %c0_i32_0, %c0_i32_1 : i32, i32, i32
  }
  func.func @transform_4(%arg0: i32) -> (i32, i32, i32) {
    %c0_i32 = arith.constant 0 : i32
    %c0_i32_0 = arith.constant 0 : i32
    %c0_i32_1 = arith.constant 0 : i32
    %c0_i32_2 = arith.constant 0 : i32
    return %c0_i32, %c0_i32_0, %c0_i32_1 : i32, i32, i32
  }
  func.func @transform_5(%arg0: i32) -> (i32, i32) {
    %c0_i32 = arith.constant 0 : i32
    %c0_i32_0 = arith.constant 0 : i32
    %c0_i32_1 = arith.constant 0 : i32
    return %c0_i32, %c0_i32_0 : i32, i32
  }
  func.func @transform_6(%arg0: i32) -> (i32, i32) {
    %c0_i32 = arith.constant 0 : i32
    %c0_i32_0 = arith.constant 0 : i32
    %c0_i32_1 = arith.constant 0 : i32
    return %c0_i32, %c0_i32_0 : i32, i32
  }
  func.func @transform_7(%arg0: i32) -> (i32, i32) {
    %c0_i32 = arith.constant 0 : i32
    %c0_i32_0 = arith.constant 0 : i32
    return %arg0, %c0_i32 : i32, i32
  }
}

</mosaic_0001>

<llo_original>
// kernel: tpu_custom_call.1
$region0: #{tpu_custom_call.1}
  #allocation0 [shape = 'u32[]', space=smem, size = 0x4, offset = 0x4, fixed_abs, tag = 'smem constant byte address 0x4 - core index']
  #allocation1 [shape = 'u32[144,128]{1,0:T(1,128)}', space=vmem, size = 0x12000, scoped, tag = 'internal scratch']
  %s0 = inlined_call_operand.vmem [shape: f32[16,8], index: 0, kind: input, shape index: {}]
  %s1 = inlined_call_operand.hbm [shape: f32[8,32], index: 1, kind: input, shape index: {}]
  %s2 = inlined_call_operand.vmem [shape: f32[1,32], index: 2, kind: input, shape index: {}]
  %s3 = inlined_call_operand.vmem [shape: f32[2,32,32], index: 3, kind: input, shape index: {}]
  %s4 = inlined_call_operand.vmem [shape: f32[2,1,32], index: 4, kind: input, shape index: {}]
  %s5 = inlined_call_operand.vmem [shape: f32[32,4], index: 5, kind: input, shape index: {}]
  %s6 = inlined_call_operand.vmem [shape: f32[1,4], index: 6, kind: input, shape index: {}]
  %s7 = inlined_call_operand.vmem [shape: f32[16,4], index: 7, kind: output, shape index: {}]
  %s8 = sld [smem:[#allocation0]]
  $region42: #{tpu_custom_call.1} parent=0
    _
  %s10 = ssub.s32 1, %s8
  %s11 = scalar_select 0, %s10, %s8
  $region1: #{tpu_custom_call.1} parent=0
    #allocation2 [shape = 'u8[4096]{0}', space=vmem, size = 0x1000, scoped, tag = 'input window, operand 1, single buffered']
    #allocation3 [shape = 's32[1]{0}', space=sflag, size = 0x4, scoped, tag = 'scoped memory for tpu_custom_call.1']
    %12 = vsyncpa [#allocation3], 0
    // Predicated region
    $region2: #{tpu_custom_call.1} parent=1 // pred_check
      _
    $region3: #{tpu_custom_call.1} parent=1 // pred_check_branch
      %14 = sbr.rel (0) target = $region5
    $region4: #{tpu_custom_call.1} parent=1 // pred_region
      _
    $region5: #{tpu_custom_call.1} parent=1 // pred_fallthru
      _
    // Predicated region
    $region6: #{tpu_custom_call.1} parent=1 // pred_check
      _
    $region7: #{tpu_custom_call.1} parent=1 // pred_check_branch
      %16 = sbr.rel (0) target = $region9
    $region8: #{tpu_custom_call.1} parent=1 // pred_region
      %s18 = ssub.s32 128, 128
      %19 = vsyncadd [#allocation3], %s18
      %s21 = sshll.u32 [#allocation2], 4
      %s22 = int_to_ptr.vmem [resolvable:$true] %s21
      %24 = dma.hbm_to_vmem [thread:$0]  %s1, 128, %s22, [#allocation3]
    $region9: #{tpu_custom_call.1} parent=1 // pred_fallthru
      _
    // Predicated region
    $region10: #{tpu_custom_call.1} parent=1 // pred_check
      _
    $region11: #{tpu_custom_call.1} parent=1 // pred_check_branch
      %26 = sbr.rel (0) target = $region13
    $region12: #{tpu_custom_call.1} parent=1 // pred_region
      _
    $region13: #{tpu_custom_call.1} parent=1 // pred_fallthru
      _
    // Predicated region
    $region14: #{tpu_custom_call.1} parent=1 // pred_check
      _
    $region15: #{tpu_custom_call.1} parent=1 // pred_check_branch
      %28 = sbr.rel (0) target = $region17
    $region16: #{tpu_custom_call.1} parent=1 // pred_region
      _
    $region17: #{tpu_custom_call.1} parent=1 // pred_fallthru
      _
    // Predicated region
    $region18: #{tpu_custom_call.1} parent=1 // pred_check
      _
    $region19: #{tpu_custom_call.1} parent=1 // pred_check_branch
      %30 = sbr.rel (0) target = $region21
    $region20: #{tpu_custom_call.1} parent=1 // pred_region
      _
    $region21: #{tpu_custom_call.1} parent=1 // pred_fallthru
      _
    // Predicated region
    $region22: #{tpu_custom_call.1} parent=1 // pred_check
      _
    $region23: #{tpu_custom_call.1} parent=1 // pred_check_branch
      %32 = sbr.rel (0) target = $region25
    $region24: #{tpu_custom_call.1} parent=1 // pred_region
      _
    $region25: #{tpu_custom_call.1} parent=1 // pred_fallthru
      _
    // Predicated region
    $region26: #{tpu_custom_call.1} parent=1 // pred_check
      _
    $region27: #{tpu_custom_call.1} parent=1 // pred_check_branch
      %34 = sbr.rel (0) target = $region29
    $region28: #{tpu_custom_call.1} parent=1 // pred_region
      _
    $region29: #{tpu_custom_call.1} parent=1 // pred_fallthru
      _
    // Predicated region
    $region30: #{tpu_custom_call.1} parent=1 // pred_check
      _
    $region31: #{tpu_custom_call.1} parent=1 // pred_check_branch
      %36 = sbr.rel (0) target = $region33
    $region32: #{tpu_custom_call.1} parent=1 // pred_region
      %37 = dma.done [#allocation3], 128
    $region33: #{tpu_custom_call.1} parent=1 // pred_fallthru
      _
    %v38 = vld [vmem:[%s0] sm:$0xff]
    %v39 = vld [vmem:[%s0 + $0x8] sm:$0xff]
    %v40 = vld [vmem:[#allocation2] sm:$0xff]
    %v41 = vld [vmem:[%s2] sm:$0x1]
    %v43 = vlaneseq
    %v44 = vshrl.u32 %v43, 7
    %v45 = vsub.s32 0, %v44
    %v46 = vrot.slane %v41, %v45
    %vm48 = vcmask 64512
    %v50 = vsel %vm48, %v38, 0
    %v53 = vsel %vm48, %v39, 0
    %55 = vmatprep.subr.mxu0 0.0
    %56 = vmatpush1.msra.mxu0 %v40
    %57 = vmatprep.subr.mxu0 0.0
    %58 = vmatpush1.msra.mxu0 0.0
    %59 = vmatprep.subr.mxu0 0.0
    %60 = vmatpush1.msra.mxu0 0.0
    %61 = vmatprep.subr.mxu0 0.0
    %62 = vmatpush1.msra.mxu0 0.0
    %63 = vmatprep.subr.mxu0 0.0
    %64 = vmatpush1.msra.mxu0 0.0
    %65 = vmatprep.subr.mxu0 0.0
    %66 = vmatpush1.msra.mxu0 0.0
    %67 = vmatprep.subr.mxu0 0.0
    %68 = vmatpush1.msra.mxu0 0.0
    %69 = vmatprep.subr.mxu0 0.0
    %70 = vmatpush1.msra.mxu0 0.0
    %71 = vmatprep.subr.mxu0 0.0
    %72 = vmatpush1.msra.mxu0 0.0
    %73 = vmatprep.subr.mxu0 0.0
    %74 = vmatpush1.msra.mxu0 0.0
    %75 = vmatprep.subr.mxu0 0.0
    %76 = vmatpush1.msra.mxu0 0.0
    %77 = vmatprep.subr.mxu0 0.0
    %78 = vmatpush1.msra.mxu0 0.0
    %79 = vmatprep.subr.mxu0 0.0
    %80 = vmatpush1.msra.mxu0 0.0
    %81 = vmatprep.subr.mxu0 0.0
    %82 = vmatpush1.msra.mxu0 0.0
    %83 = vmatprep.subr.mxu0 0.0
    %84 = vmatpush1.msra.mxu0 0.0
    %85 = vmatprep.subr.mxu0 0.0
    %86 = vmatpush1.msra.mxu0 0.0
    %87 = vmatprep.subr.mxu0 0.0
    %88 = vmatpush1.msra.mxu0 0.0
    %89 = vmatprep.subr.mxu0 0.0
    %90 = vmatpush1.msra.mxu0 0.0
    %91 = vmatprep.subr.mxu0 0.0
    %92 = vmatpush1.msra.mxu0 0.0
    %93 = vmatprep.subr.mxu0 0.0
    %94 = vmatpush1.msra.mxu0 0.0
    %95 = vmatprep.subr.mxu0 0.0
    %96 = vmatpush1.msra.mxu0 0.0
    %97 = vmatprep.subr.mxu0 0.0
    %98 = vmatpush1.msra.mxu0 0.0
    %99 = vmatprep.subr.mxu0 0.0
    %100 = vmatpush1.msra.mxu0 0.0
    %101 = vmatprep.subr.mxu0 0.0
    %102 = vmatpush1.msra.mxu0 0.0
    %103 = vmatprep.subr.mxu0 0.0
    %104 = vmatpush1.msra.mxu0 0.0
    %105 = vmatprep.subr.mxu0 0.0
    %106 = vmatpush1.msra.mxu0 0.0
    %107 = vmatprep.subr.mxu0 0.0
    %108 = vmatpush1.msra.mxu0 0.0
    %109 = vmatprep.subr.mxu0 0.0
    %110 = vmatpush1.msra.mxu0 0.0
    %111 = vmatprep.subr.mxu0 0.0
    %112 = vmatpush1.msra.mxu0 0.0
    %113 = vmatprep.subr.mxu0 0.0
    %114 = vmatpush1.msra.mxu0 0.0
    %115 = vmatprep.subr.mxu0 0.0
    %116 = vmatpush1.msra.mxu0 0.0
    %117 = vmatprep.subr.mxu0 0.0
    %118 = vmatpush1.msra.mxu0 0.0
    %119 = vmatprep.mubr.f32.mxu0 0.0
    %120 = vmatmul.mubr.f32.gmra.mrb[0].mxu0 %v50
    %v121 = vpop.f32.mrb[0].mxu0
    %v122 = vadd.f32 %v46, %v121
    %v123 = vpop.f32.mrb[0].mxu0
    %124 = vmatprep.mubr.f32.mxu0 0.0
    %125 = vmatmul.mubr.f32.gmra.mrb[0].mxu0 %v53
    %v126 = vpop.f32.mrb[0].mxu0
    %v127 = vadd.f32 %v46, %v126
    %v128 = vpop.f32.mrb[0].mxu0
    %129 = vdwg.mxu0
    %v130 = vtanh.pop %v122
    %v131 = vtanh.pop %v127
    %v132 = vld [vmem:[%s3] sm:$0xff]
    %v133 = vld [vmem:[%s3 + $0x8] sm:$0xff]
    %v134 = vld [vmem:[%s3 + $0x10] sm:$0xff]
    %v135 = vld [vmem:[%s3 + $0x18] sm:$0xff]
    %v136 = vld [vmem:[%s4] sm:$0x1]
    %v138 = vlaneseq
    %v139 = vshrl.u32 %v138, 7
    %v140 = vsub.s32 0, %v139
    %v141 = vrot.slane %v136, %v140
    %vm143 = vcmask 261120
    %v145 = vsel %vm143, %v130, 0
    %v148 = vsel %vm143, %v131, 0
    %150 = vmatprep.subr.mxu0 0.0
    %151 = vmatpush1.msra.mxu0 %v132
    %152 = vmatprep.subr.mxu0 0.0
    %153 = vmatpush1.msra.mxu0 %v133
    %154 = vmatprep.subr.mxu0 0.0
    %155 = vmatpush1.msra.mxu0 %v134
    %156 = vmatprep.subr.mxu0 0.0
    %157 = vmatpush1.msra.mxu0 %v135
    %158 = vmatprep.subr.mxu0 0.0
    %159 = vmatpush1.msra.mxu0 0.0
    %160 = vmatprep.subr.mxu0 0.0
    %161 = vmatpush1.msra.mxu0 0.0
    %162 = vmatprep.subr.mxu0 0.0
    %163 = vmatpush1.msra.mxu0 0.0
    %164 = vmatprep.subr.mxu0 0.0
    %165 = vmatpush1.msra.mxu0 0.0
    %166 = vmatprep.subr.mxu0 0.0
    %167 = vmatpush1.msra.mxu0 0.0
    %168 = vmatprep.subr.mxu0 0.0
    %169 = vmatpush1.msra.mxu0 0.0
    %170 = vmatprep.subr.mxu0 0.0
    %171 = vmatpush1.msra.mxu0 0.0
    %172 = vmatprep.subr.mxu0 0.0
    %173 = vmatpush1.msra.mxu0 0.0
    %174 = vmatprep.subr.mxu0 0.0
    %175 = vmatpush1.msra.mxu0 0.0
    %176 = vmatprep.subr.mxu0 0.0
    %177 = vmatpush1.msra.mxu0 0.0
    %178 = vmatprep.subr.mxu0 0.0
    %179 = vmatpush1.msra.mxu0 0.0
    %180 = vmatprep.subr.mxu0 0.0
    %181 = vmatpush1.msra.mxu0 0.0
    %182 = vmatprep.subr.mxu0 0.0
    %183 = vmatpush1.msra.mxu0 0.0
    %184 = vmatprep.subr.mxu0 0.0
    %185 = vmatpush1.msra.mxu0 0.0
    %186 = vmatprep.subr.mxu0 0.0
    %187 = vmatpush1.msra.mxu0 0.0
    %188 = vmatprep.subr.mxu0 0.0
    %189 = vmatpush1.msra.mxu0 0.0
    %190 = vmatprep.subr.mxu0 0.0
    %191 = vmatpush1.msra.mxu0 0.0
    %192 = vmatprep.subr.mxu0 0.0
    %193 = vmatpush1.msra.mxu0 0.0
    %194 = vmatprep.subr.mxu0 0.0
    %195 = vmatpush1.msra.mxu0 0.0
    %196 = vmatprep.subr.mxu0 0.0
    %197 = vmatpush1.msra.mxu0 0.0
    %198 = vmatprep.subr.mxu0 0.0
    %199 = vmatpush1.msra.mxu0 0.0
    %200 = vmatprep.subr.mxu0 0.0
    %201 = vmatpush1.msra.mxu0 0.0
    %202 = vmatprep.subr.mxu0 0.0
    %203 = vmatpush1.msra.mxu0 0.0
    %204 = vmatprep.subr.mxu0 0.0
    %205 = vmatpush1.msra.mxu0 0.0
    %206 = vmatprep.subr.mxu0 0.0
    %207 = vmatpush1.msra.mxu0 0.0
    %208 = vmatprep.subr.mxu0 0.0
    %209 = vmatpush1.msra.mxu0 0.0
    %210 = vmatprep.subr.mxu0 0.0
    %211 = vmatpush1.msra.mxu0 0.0
    %212 = vmatprep.subr.mxu0 0.0
    %213 = vmatpush1.msra.mxu0 0.0
    %214 = vmatprep.mubr.f32.mxu0 0.0
    %215 = vmatmul.mubr.f32.gmra.mrb[0].mxu0 %v145
    %v216 = vpop.f32.mrb[0].mxu0
    %v217 = vadd.f32 %v141, %v216
    %v218 = vpop.f32.mrb[0].mxu0
    %219 = vmatprep.mubr.f32.mxu0 0.0
    %220 = vmatmul.mubr.f32.gmra.mrb[0].mxu0 %v148
    %v221 = vpop.f32.mrb[0].mxu0
    %v222 = vadd.f32 %v141, %v221
    %v223 = vpop.f32.mrb[0].mxu0
    %224 = vdwg.mxu0
    %v225 = vtanh.pop %v217
    %v226 = vtanh.pop %v222
    %s227 = scalar_lea.vmem %s3, 32
    %v228 = vld [vmem:[%s227] sm:$0xff]
    %v229 = vld [vmem:[%s227 + $0x8] sm:$0xff]
    %v230 = vld [vmem:[%s227 + $0x10] sm:$0xff]
    %v231 = vld [vmem:[%s227 + $0x18] sm:$0xff]
    %s232 = scalar_lea.vmem %s4, 1
    %v233 = vld [vmem:[%s232] sm:$0x1]
    %v235 = vlaneseq
    %v236 = vshrl.u32 %v235, 7
    %v237 = vsub.s32 0, %v236
    %v238 = vrot.slane %v233, %v237
    %v241 = vsel %vm143, %v225, 0
    %v244 = vsel %vm143, %v226, 0
    %246 = vmatprep.subr.mxu0 0.0
    %247 = vmatpush1.msra.mxu0 %v228
    %248 = vmatprep.subr.mxu0 0.0
    %249 = vmatpush1.msra.mxu0 %v229
    %250 = vmatprep.subr.mxu0 0.0
    %251 = vmatpush1.msra.mxu0 %v230
    %252 = vmatprep.subr.mxu0 0.0
    %253 = vmatpush1.msra.mxu0 %v231
    %254 = vmatprep.subr.mxu0 0.0
    %255 = vmatpush1.msra.mxu0 0.0
    %256 = vmatprep.subr.mxu0 0.0
    %257 = vmatpush1.msra.mxu0 0.0
    %258 = vmatprep.subr.mxu0 0.0
    %259 = vmatpush1.msra.mxu0 0.0
    %260 = vmatprep.subr.mxu0 0.0
    %261 = vmatpush1.msra.mxu0 0.0
    %262 = vmatprep.subr.mxu0 0.0
    %263 = vmatpush1.msra.mxu0 0.0
    %264 = vmatprep.subr.mxu0 0.0
    %265 = vmatpush1.msra.mxu0 0.0
    %266 = vmatprep.subr.mxu0 0.0
    %267 = vmatpush1.msra.mxu0 0.0
    %268 = vmatprep.subr.mxu0 0.0
    %269 = vmatpush1.msra.mxu0 0.0
    %270 = vmatprep.subr.mxu0 0.0
    %271 = vmatpush1.msra.mxu0 0.0
    %272 = vmatprep.subr.mxu0 0.0
    %273 = vmatpush1.msra.mxu0 0.0
    %274 = vmatprep.subr.mxu0 0.0
    %275 = vmatpush1.msra.mxu0 0.0
    %276 = vmatprep.subr.mxu0 0.0
    %277 = vmatpush1.msra.mxu0 0.0
    %278 = vmatprep.subr.mxu0 0.0
    %279 = vmatpush1.msra.mxu0 0.0
    %280 = vmatprep.subr.mxu0 0.0
    %281 = vmatpush1.msra.mxu0 0.0
    %282 = vmatprep.subr.mxu0 0.0
    %283 = vmatpush1.msra.mxu0 0.0
    %284 = vmatprep.subr.mxu0 0.0
    %285 = vmatpush1.msra.mxu0 0.0
    %286 = vmatprep.subr.mxu0 0.0
    %287 = vmatpush1.msra.mxu0 0.0
    %288 = vmatprep.subr.mxu0 0.0
    %289 = vmatpush1.msra.mxu0 0.0
    %290 = vmatprep.subr.mxu0 0.0
    %291 = vmatpush1.msra.mxu0 0.0
    %292 = vmatprep.subr.mxu0 0.0
    %293 = vmatpush1.msra.mxu0 0.0
    %294 = vmatprep.subr.mxu0 0.0
    %295 = vmatpush1.msra.mxu0 0.0
    %296 = vmatprep.subr.mxu0 0.0
    %297 = vmatpush1.msra.mxu0 0.0
    %298 = vmatprep.subr.mxu0 0.0
    %299 = vmatpush1.msra.mxu0 0.0
    %300 = vmatprep.subr.mxu0 0.0
    %301 = vmatpush1.msra.mxu0 0.0
    %302 = vmatprep.subr.mxu0 0.0
    %303 = vmatpush1.msra.mxu0 0.0
    %304 = vmatprep.subr.mxu0 0.0
    %305 = vmatpush1.msra.mxu0 0.0
    %306 = vmatprep.subr.mxu0 0.0
    %307 = vmatpush1.msra.mxu0 0.0
    %308 = vmatprep.subr.mxu0 0.0
    %309 = vmatpush1.msra.mxu0 0.0
    %310 = vmatprep.mubr.f32.mxu0 0.0
    %311 = vmatmul.mubr.f32.gmra.mrb[0].mxu0 %v241
    %v312 = vpop.f32.mrb[0].mxu0
    %v313 = vadd.f32 %v238, %v312
    %v314 = vpop.f32.mrb[0].mxu0
    %315 = vmatprep.mubr.f32.mxu0 0.0
    %316 = vmatmul.mubr.f32.gmra.mrb[0].mxu0 %v244
    %v317 = vpop.f32.mrb[0].mxu0
    %v318 = vadd.f32 %v238, %v317
    %v319 = vpop.f32.mrb[0].mxu0
    %320 = vdwg.mxu0
    %v321 = vtanh.pop %v313
    %v322 = vtanh.pop %v318
    %v323 = vld [vmem:[%s5] sm:$0xff]
    %v324 = vld [vmem:[%s5 + $0x8] sm:$0xff]
    %v325 = vld [vmem:[%s5 + $0x10] sm:$0xff]
    %v326 = vld [vmem:[%s5 + $0x18] sm:$0xff]
    %v327 = vld [vmem:[%s6] sm:$0x1]
    %v329 = vlaneseq
    %v330 = vshrl.u32 %v329, 7
    %v331 = vsub.s32 0, %v330
    %v332 = vrot.slane %v327, %v331
    %v335 = vsel %vm143, %v321, 0
    %v338 = vsel %vm143, %v322, 0
    %340 = vmatprep.subr.mxu0 0.0
    %341 = vmatpush1.msra.mxu0 %v323
    %342 = vmatprep.subr.mxu0 0.0
    %343 = vmatpush1.msra.mxu0 %v324
    %344 = vmatprep.subr.mxu0 0.0
    %345 = vmatpush1.msra.mxu0 %v325
    %346 = vmatprep.subr.mxu0 0.0
    %347 = vmatpush1.msra.mxu0 %v326
    %348 = vmatprep.subr.mxu0 0.0
    %349 = vmatpush1.msra.mxu0 0.0
    %350 = vmatprep.subr.mxu0 0.0
    %351 = vmatpush1.msra.mxu0 0.0
    %352 = vmatprep.subr.mxu0 0.0
    %353 = vmatpush1.msra.mxu0 0.0
    %354 = vmatprep.subr.mxu0 0.0
    %355 = vmatpush1.msra.mxu0 0.0
    %356 = vmatprep.subr.mxu0 0.0
    %357 = vmatpush1.msra.mxu0 0.0
    %358 = vmatprep.subr.mxu0 0.0
    %359 = vmatpush1.msra.mxu0 0.0
    %360 = vmatprep.subr.mxu0 0.0
    %361 = vmatpush1.msra.mxu0 0.0
    %362 = vmatprep.subr.mxu0 0.0
    %363 = vmatpush1.msra.mxu0 0.0
    %364 = vmatprep.subr.mxu0 0.0
    %365 = vmatpush1.msra.mxu0 0.0
    %366 = vmatprep.subr.mxu0 0.0
    %367 = vmatpush1.msra.mxu0 0.0
    %368 = vmatprep.subr.mxu0 0.0
    %369 = vmatpush1.msra.mxu0 0.0
    %370 = vmatprep.subr.mxu0 0.0
    %371 = vmatpush1.msra.mxu0 0.0
    %372 = vmatprep.subr.mxu0 0.0
    %373 = vmatpush1.msra.mxu0 0.0
    %374 = vmatprep.subr.mxu0 0.0
    %375 = vmatpush1.msra.mxu0 0.0
    %376 = vmatprep.subr.mxu0 0.0
    %377 = vmatpush1.msra.mxu0 0.0
    %378 = vmatprep.subr.mxu0 0.0
    %379 = vmatpush1.msra.mxu0 0.0
    %380 = vmatprep.subr.mxu0 0.0
    %381 = vmatpush1.msra.mxu0 0.0
    %382 = vmatprep.subr.mxu0 0.0
    %383 = vmatpush1.msra.mxu0 0.0
    %384 = vmatprep.subr.mxu0 0.0
    %385 = vmatpush1.msra.mxu0 0.0
    %386 = vmatprep.subr.mxu0 0.0
    %387 = vmatpush1.msra.mxu0 0.0
    %388 = vmatprep.subr.mxu0 0.0
    %389 = vmatpush1.msra.mxu0 0.0
    %390 = vmatprep.subr.mxu0 0.0
    %391 = vmatpush1.msra.mxu0 0.0
    %392 = vmatprep.subr.mxu0 0.0
    %393 = vmatpush1.msra.mxu0 0.0
    %394 = vmatprep.subr.mxu0 0.0
    %395 = vmatpush1.msra.mxu0 0.0
    %396 = vmatprep.subr.mxu0 0.0
    %397 = vmatpush1.msra.mxu0 0.0
    %398 = vmatprep.subr.mxu0 0.0
    %399 = vmatpush1.msra.mxu0 0.0
    %400 = vmatprep.subr.mxu0 0.0
    %401 = vmatpush1.msra.mxu0 0.0
    %402 = vmatprep.subr.mxu0 0.0
    %403 = vmatpush1.msra.mxu0 0.0
    %404 = vmatprep.mubr.f32.mxu0 0.0
    %405 = vmatmul.mubr.f32.gmra.mrb[0].mxu0 %v335
    %v406 = vpop.f32.mrb[0].mxu0
    %v407 = vadd.f32 %v332, %v406
    %v408 = vpop.f32.mrb[0].mxu0
    %409 = vmatprep.mubr.f32.mxu0 0.0
    %410 = vmatmul.mubr.f32.gmra.mrb[0].mxu0 %v338
    %v411 = vpop.f32.mrb[0].mxu0
    %v412 = vadd.f32 %v332, %v411
    %v413 = vpop.f32.mrb[0].mxu0
    %414 = vdwg.mxu0
    %vm415 = vcmask 31744
    %416 = vst.msk [vmem:[%s7] sm:$0xff] %vm415, %v407
    %417 = vst.msk [vmem:[%s7 + $0x8] sm:$0xff] %vm415, %v412
    // Predicated region
    $region34: #{tpu_custom_call.1} parent=1 // pred_check
      _
    $region35: #{tpu_custom_call.1} parent=1 // pred_check_branch
      %419 = sbr.rel (0) target = $region37
    $region36: #{tpu_custom_call.1} parent=1 // pred_region
      _
    $region37: #{tpu_custom_call.1} parent=1 // pred_fallthru
      _
    // Predicated region
    $region38: #{tpu_custom_call.1} parent=1 // pred_check
      _
    $region39: #{tpu_custom_call.1} parent=1 // pred_check_branch
      %421 = sbr.rel (0) target = $region41
    $region40: #{tpu_custom_call.1} parent=1 // pred_region
      _
    $region41: #{tpu_custom_call.1} parent=1 // pred_fallthru
      _
    %422 = vsyncpa [#allocation3], 1

</llo_original>
